<compile_context>
chip_gen: v7x
topology: tpu7x:2x2x1
jax: 0.10.0
libtpu: 0.0.40
codegen_flags: <defaults>
</compile_context>

<pallas_src>
import jax
import jax.numpy as jnp
from jax.experimental import pallas as pl
from jax.experimental.pallas import tpu as pltpu


def _scaling_kernel(a_ref, b_ref, x_ref, o_ref):
    # a_ref, b_ref: VMEM (C, 1) float32 (per-channel scalars, resident)
    # x_ref, o_ref: VMEM (2, C, T)  -- real/imag on the leading axis
    a = a_ref[...]                          # (C, 1)
    b = b_ref[...]                          # (C, 1)
    x_c = x_ref[0].astype(jnp.float32)      # (C, T) "real"
    x_d = x_ref[1].astype(jnp.float32)      # (C, T) "imag"
    o_ref[0] = (a * x_c - b * x_d).astype(o_ref.dtype)   # real component
    o_ref[1] = (b * x_c + a * x_d).astype(o_ref.dtype)   # imag component


def _choose_tile(hw, c, itemsize, target_bytes=1 << 20):
    """Largest lane-dense (multiple-of-128) divisor of hw with
    2*C*tile*itemsize <= ~target_bytes. Falls back to full hw if hw is not
    128-aligned (block dim == full array dim is always legal)."""
    if hw <= 128 or hw % 128 != 0:
        return hw
    cap = max(128, (target_bytes // (2 * c * itemsize)) // 128 * 128)
    tile = min(hw, cap)
    while hw % tile:
        tile -= 128
    return tile


def scaling_layer(x, a_bias, b_bias):
    """
    x:       [B, 2, C, H, W]
    a_bias:  [C]   (or [1] for g_global -- broadcast in the wrapper)
    b_bias:  [C]
    returns: [B, 2, C, H, W]
    """
    B, CC, C, H, W = x.shape
    assert CC == 2
    # g_global case: broadcast the single scalar to every channel (glue).
    if a_bias.shape[0] == 1 and C != 1:
        a_bias = jnp.broadcast_to(a_bias, (C,))
        b_bias = jnp.broadcast_to(b_bias, (C,))

    HW = H * W
    xr = x.reshape(B, 2, C, HW)                       # free, contiguous reshape
    a2 = a_bias.astype(jnp.float32).reshape(C, 1)
    b2 = b_bias.astype(jnp.float32).reshape(C, 1)

    itemsize = jnp.dtype(x.dtype).itemsize
    tile = _choose_tile(HW, C, itemsize)
    num_tiles = HW // tile

    # Batch dim squeezed (None); last two block dims (C, tile) are
    # full-C x lane-dense-tile -> unmasked, aligned loads/stores.
    x_spec = pl.BlockSpec((None, 2, C, tile), lambda b, t: (b, 0, 0, t))
    s_spec = pl.BlockSpec((C, 1), lambda b, t: (0, 0))   # resident scalars

    out = pl.pallas_call(
        _scaling_kernel,
        out_shape=jax.ShapeDtypeStruct((B, 2, C, HW), x.dtype),
        grid=(B, num_tiles),
        in_specs=[s_spec, s_spec, x_spec],
        out_specs=x_spec,
        compiler_params=pltpu.CompilerParams(
            dimension_semantics=("parallel", "parallel")),
    )(a2, b2, xr)
    return out.reshape(B, 2, C, H, W)


def _reference(x, a_bias, b_bias):
    x_c = x[:, 0]
    x_d = x[:, 1]
    a = a_bias[None, :, None, None]
    b = b_bias[None, :, None, None]
    real = a * x_c - b * x_d
    imag = b * x_c + a * x_d
    return jnp.stack([real, imag], axis=1)


if __name__ == "__main__":
    B, C, H, W = 2, 4, 16, 16
    key = jax.random.PRNGKey(0)
    kx, ka, kb = jax.random.split(key, 3)

    x = jax.random.normal(kx, (B, 2, C, H, W), dtype=jnp.float32)
    # mimic th.rand(channels): uniform [0, 1)
    a_bias = jax.random.uniform(ka, (C,), dtype=jnp.float32)
    b_bias = jax.random.uniform(kb, (C,), dtype=jnp.float32)

    out = scaling_layer(x, a_bias, b_bias)
    out = jax.block_until_ready(out)

    ref = _reference(x, a_bias, b_bias)
    assert out.shape == (B, 2, C, H, W)
    assert jnp.allclose(out, ref, atol=1e-6, rtol=1e-6)

    # g_global path (single shared scalar) also goes through the kernel.
    ag = jax.random.uniform(ka, (1,), dtype=jnp.float32)
    bg = jax.random.uniform(kb, (1,), dtype=jnp.float32)
    out_g = jax.block_until_ready(scaling_layer(x, ag, bg))
    ref_g = _reference(x, jnp.broadcast_to(ag, (C,)), jnp.broadcast_to(bg, (C,)))
    assert jnp.allclose(out_g, ref_g, atol=1e-6, rtol=1e-6)

    print("KERNEL_OK")
</pallas_src>

<mosaic_0001>
module attributes {stable_mosaic.version = 11 : i64} {
  func.func @_scaling_kernel(%arg0: i32, %arg1: i32, %arg2: memref<4x1xf32, #tpu.memory_space<vmem>>, %arg3: memref<4x1xf32, #tpu.memory_space<vmem>>, %arg4: memref<1x2x4x256xf32, #tpu.memory_space<vmem>>, %arg5: memref<1x2x4x256xf32, #tpu.memory_space<vmem>>) attributes {dimension_semantics = [#tpu.dimension_semantics<parallel>, #tpu.dimension_semantics<parallel>], iteration_bounds = array<i64: 2, 1>, scalar_prefetch = 0 : i64, scratch_operands = 0 : i64, tpu.core_type = #tpu.core_type<tc>, window_params = [{pipeline_mode = #tpu.pipeline_mode<synchronous>, transform_indices = @transform_0, window_bounds = array<i64: 4, 1>}, {pipeline_mode = #tpu.pipeline_mode<synchronous>, transform_indices = @transform_1, window_bounds = array<i64: 4, 1>}, {transform_indices = @transform_2, window_bounds = array<i64: 1, 2, 4, 256>}, {transform_indices = @transform_3, window_bounds = array<i64: 1, 2, 4, 256>}]} {
    %c0 = arith.constant 0 : index
    %c0_0 = arith.constant 0 : index
    %0 = vector.load %arg2[%c0, %c0_0] : memref<4x1xf32, #tpu.memory_space<vmem>>, vector<4x1xf32>
    %c0_1 = arith.constant 0 : index
    %c0_2 = arith.constant 0 : index
    %1 = vector.load %arg3[%c0_1, %c0_2] : memref<4x1xf32, #tpu.memory_space<vmem>>, vector<4x1xf32>
    %c0_3 = arith.constant 0 : index
    %c0_4 = arith.constant 0 : index
    %c0_5 = arith.constant 0 : index
    %c0_6 = arith.constant 0 : index
    %2 = vector.load %arg4[%c0_3, %c0_4, %c0_5, %c0_6] : memref<1x2x4x256xf32, #tpu.memory_space<vmem>>, vector<1x1x4x256xf32>
    %3 = vector.shape_cast %2 : vector<1x1x4x256xf32> to vector<4x256xf32>
    %c0_7 = arith.constant 0 : index
    %c1 = arith.constant 1 : index
    %c0_8 = arith.constant 0 : index
    %c0_9 = arith.constant 0 : index
    %4 = vector.load %arg4[%c0_7, %c1, %c0_8, %c0_9] : memref<1x2x4x256xf32, #tpu.memory_space<vmem>>, vector<1x1x4x256xf32>
    %5 = vector.shape_cast %4 : vector<1x1x4x256xf32> to vector<4x256xf32>
    %6 = vector.broadcast %0 : vector<4x1xf32> to vector<4x256xf32>
    %7 = arith.mulf %6, %3 : vector<4x256xf32>
    %8 = vector.broadcast %1 : vector<4x1xf32> to vector<4x256xf32>
    %9 = arith.mulf %8, %5 : vector<4x256xf32>
    %10 = arith.subf %7, %9 : vector<4x256xf32>
    %c0_10 = arith.constant 0 : index
    %c0_11 = arith.constant 0 : index
    %c0_12 = arith.constant 0 : index
    %c0_13 = arith.constant 0 : index
    %11 = vector.load %arg5[%c0_10, %c0_11, %c0_12, %c0_13] : memref<1x2x4x256xf32, #tpu.memory_space<vmem>>, vector<1x1x4x256xf32>
    %12 = vector.shape_cast %11 : vector<1x1x4x256xf32> to vector<4x256xf32>
    %13 = vector.shape_cast %10 : vector<4x256xf32> to vector<1x1x4x256xf32>
    tpu.vector_store %arg5[%c0_10, %c0_11, %c0_12, %c0_13], %13 {strides = array<i32>} : memref<1x2x4x256xf32, #tpu.memory_space<vmem>>, vector<1x1x4x256xf32>,
    %14 = vector.broadcast %1 : vector<4x1xf32> to vector<4x256xf32>
    %15 = arith.mulf %14, %3 : vector<4x256xf32>
    %16 = vector.broadcast %0 : vector<4x1xf32> to vector<4x256xf32>
    %17 = arith.mulf %16, %5 : vector<4x256xf32>
    %18 = arith.addf %15, %17 : vector<4x256xf32>
    %c0_14 = arith.constant 0 : index
    %c1_15 = arith.constant 1 : index
    %c0_16 = arith.constant 0 : index
    %c0_17 = arith.constant 0 : index
    %19 = vector.load %arg5[%c0_14, %c1_15, %c0_16, %c0_17] : memref<1x2x4x256xf32, #tpu.memory_space<vmem>>, vector<1x1x4x256xf32>
    %20 = vector.shape_cast %19 : vector<1x1x4x256xf32> to vector<4x256xf32>
    %21 = vector.shape_cast %18 : vector<4x256xf32> to vector<1x1x4x256xf32>
    tpu.vector_store %arg5[%c0_14, %c1_15, %c0_16, %c0_17], %21 {strides = array<i32>} : memref<1x2x4x256xf32, #tpu.memory_space<vmem>>, vector<1x1x4x256xf32>,
    return
  }
  func.func @transform_0(%arg0: i32, %arg1: i32) -> (i32, i32) {
    %c0_i32 = arith.constant 0 : i32
    %c0_i32_0 = arith.constant 0 : i32
    %c0_i32_1 = arith.constant 0 : i32
    return %c0_i32, %c0_i32_0 : i32, i32
  }
  func.func @transform_1(%arg0: i32, %arg1: i32) -> (i32, i32) {
    %c0_i32 = arith.constant 0 : i32
    %c0_i32_0 = arith.constant 0 : i32
    %c0_i32_1 = arith.constant 0 : i32
    return %c0_i32, %c0_i32_0 : i32, i32
  }
  func.func @transform_2(%arg0: i32, %arg1: i32) -> (i32, i32, i32, i32) {
    %c0_i32 = arith.constant 0 : i32
    %c0_i32_0 = arith.constant 0 : i32
    %c0_i32_1 = arith.constant 0 : i32
    return %arg0, %c0_i32, %c0_i32_0, %arg1 : i32, i32, i32, i32
  }
  func.func @transform_3(%arg0: i32, %arg1: i32) -> (i32, i32, i32, i32) {
    %c0_i32 = arith.constant 0 : i32
    %c0_i32_0 = arith.constant 0 : i32
    %c0_i32_1 = arith.constant 0 : i32
    return %arg0, %c0_i32, %c0_i32_0, %arg1 : i32, i32, i32, i32
  }
}

</mosaic_0001>

<llo_original>
// kernel: tpu_custom_call.1
$region0: #{tpu_custom_call.1}
  #allocation0 [shape = 'u32[]', space=smem, size = 0x4, offset = 0x4, fixed_abs, tag = 'smem constant byte address 0x4 - core index']
  #allocation1 [shape = 'u32[144,128]{1,0:T(1,128)}', space=vmem, size = 0x12000, scoped, tag = 'internal scratch']
  %s0 = inlined_call_operand.vmem [shape: f32[4,1], index: 0, kind: input, shape index: {}]
  %s1 = inlined_call_operand.vmem [shape: f32[4,1], index: 1, kind: input, shape index: {}]
  %s2 = inlined_call_operand.hbm [shape: f32[2,2,4,256], index: 2, kind: input, shape index: {}]
  %s3 = inlined_call_operand.hbm [shape: f32[2,2,4,256], index: 3, kind: output, shape index: {}]
  %s4 = sld [smem:[#allocation0]]
  $region49: #{tpu_custom_call.1} parent=0
    _
  %s6 = ssub.s32 1, %s4
  %s7 = scalar_select 0, %s6, %s4
  $region1: #{tpu_custom_call.1} parent=0
    #allocation2 [shape = 'u8[16384]{0}', space=vmem, size = 0x4000, scoped, tag = 'input window, operand 2']
    #allocation3 [shape = 's32[2]{0}', space=sflag, size = 0x8, scoped, tag = 'scoped memory for tpu_custom_call.1']
    #allocation4 [shape = 's32[2]{0}', space=sflag, size = 0x8, scoped, tag = 'scoped memory for tpu_custom_call.1']
    #allocation5 [shape = 'u8[16384]{0}', space=vmem, size = 0x4000, scoped, tag = 'output window, operand 0']
    %8 = vsyncpa [#allocation3], 0
    %s9 = scalar_lea.sflag [#allocation3], 1
    %10 = vsyncpa %s9, 0
    %11 = vsyncpa [#allocation4], 0
    %s12 = scalar_lea.sflag [#allocation4], 1
    %13 = vsyncpa %s12, 0
    loop: start=0, step=1, limit=4
    $region2: #{tpu_custom_call.1} parent=1 // loop_pre_header
      _
    $region3: #{tpu_custom_call.1} parent=1 // loop_header
      %s15 = sphi 0, %s19
      %p16 = scmp.ge.s32.totalorder %s15, 4
      %s22 = sphi 0, %s34
      %s23 = sphi 0, %s30
      %s24 = sphi 0, %s22
      %s25 = sphi 0, %s23
      %s26 = sphi 0, %s24
      %s27 = sphi 0, %s25
      %s35 = sphi 0, %s35
      %s37 = sphi 0, %s35
      %s38 = sphi 0, %s37
      %s52 = sphi 0, %s38
      %s56 = sphi 0, %s56
      %s58 = sphi 0, %s56
      %s59 = sphi 0, %s58
      %s73 = sphi 0, %s59
      %s81 = sphi 0, %s83
      %s84 = sphi 0, %s81
      %s85 = sphi 0, %s84
      %s101 = sphi 0, %s85
      %s109 = sphi 0, %s111
      %s112 = sphi 0, %s109
      %s113 = sphi 0, %s112
      %s129 = sphi 0, %s113
    $region4: #{tpu_custom_call.1} parent=1 // loop_header_branch
      %18 = sbr.rel (%p16) target = $region8
    $region5: #{tpu_custom_call.1} parent=1 // loop_body
      %s20 = ssub.s32 %s15, 1
      %s21 = ssub.s32 %s15, 2
      %s28 = sadd.s32 1, %s23
      %p29 = scmp.ge.s32.totalorder %s28, 1
      %s30 = scalar_select %p29, 0, %s28
      %s31 = sadd.s32 1, %s22
      %s32 = scalar_select %p29, %s31, %s22
      %p33 = scmp.ge.s32.totalorder %s32, 2
      %s34 = scalar_select %p33, 0, %s32
      %s36 = sadd.s32 %s35, 1
      %p39 = scmp.eq.s32.totalorder %s15, 1
      %p40 = scmp.ne.s32.totalorder %s35, %s37
      %p41 = scmp.eq.s32.totalorder %s15, 0
      %p42 = por %p40, %p41
      %p43 = scmp.ne.s32.totalorder %s35, %s37
      %p44 = scmp.eq.s32.totalorder %s20, 1
      %p45 = por %p43, %p44
      %p46 = scmp.ne.s32.totalorder %s37, %s38
      %p47 = scmp.eq.s32.totalorder %s20, 0
      %p48 = por %p46, %p47
      %p49 = scmp.ne.s32.totalorder %s37, %s38
      %p50 = scmp.eq.s32.totalorder %s21, 1
      %p51 = por %p49, %p50
      %p53 = scmp.ne.s32.totalorder %s38, %s52
      %p54 = scmp.eq.s32.totalorder %s21, 0
      %p55 = por %p53, %p54
      %s57 = sadd.s32 %s56, 1
      %p60 = scmp.eq.s32.totalorder %s15, 1
      %p61 = scmp.ne.s32.totalorder %s56, %s58
      %p62 = scmp.eq.s32.totalorder %s15, 0
      %p63 = por %p61, %p62
      %p64 = scmp.ne.s32.totalorder %s56, %s58
      %p65 = scmp.eq.s32.totalorder %s20, 1
      %p66 = por %p64, %p65
      %p67 = scmp.ne.s32.totalorder %s58, %s59
      %p68 = scmp.eq.s32.totalorder %s20, 0
      %p69 = por %p67, %p68
      %p70 = scmp.ne.s32.totalorder %s58, %s59
      %p71 = scmp.eq.s32.totalorder %s21, 1
      %p72 = por %p70, %p71
      %p74 = scmp.ne.s32.totalorder %s59, %s73
      %p75 = scmp.eq.s32.totalorder %s21, 0
      %p76 = por %p74, %p75
      %s77 = ssub.s32 %s22, %s34
      %s78 = ssub.s32 %s23, %s30
      %s79 = sor.u32 %s77, %s78
      %p80 = scmp.eq.s32.totalorder %s79, 0
      %s82 = sadd.s32 %s81, 1
      %s83 = scalar_select %p80, %s81, %s82
      %p86 = pneg %p80
      %p87 = scmp.eq.s32.totalorder %s15, 1
      %p88 = por %p86, %p87
      %p89 = scmp.ne.s32.totalorder %s81, %s84
      %p90 = scmp.eq.s32.totalorder %s15, 0
      %p91 = por %p89, %p90
      %p92 = scmp.ne.s32.totalorder %s81, %s84
      %p93 = scmp.eq.s32.totalorder %s20, 1
      %p94 = por %p92, %p93
      %p95 = scmp.ne.s32.totalorder %s84, %s85
      %p96 = scmp.eq.s32.totalorder %s20, 0
      %p97 = por %p95, %p96
      %p98 = scmp.ne.s32.totalorder %s84, %s85
      %p99 = scmp.eq.s32.totalorder %s21, 1
      %p100 = por %p98, %p99
      %p102 = scmp.ne.s32.totalorder %s85, %s101
      %p103 = scmp.eq.s32.totalorder %s21, 0
      %p104 = por %p102, %p103
      %s105 = ssub.s32 %s22, %s34
      %s106 = ssub.s32 %s23, %s30
      %s107 = sor.u32 %s105, %s106
      %p108 = scmp.eq.s32.totalorder %s107, 0
      %s110 = sadd.s32 %s109, 1
      %s111 = scalar_select %p108, %s109, %s110
      %p114 = pneg %p108
      %p115 = scmp.eq.s32.totalorder %s15, 1
      %p116 = por %p114, %p115
      %p117 = scmp.ne.s32.totalorder %s109, %s112
      %p118 = scmp.eq.s32.totalorder %s15, 0
      %p119 = por %p117, %p118
      %p120 = scmp.ne.s32.totalorder %s109, %s112
      %p121 = scmp.eq.s32.totalorder %s20, 1
      %p122 = por %p120, %p121
      %p123 = scmp.ne.s32.totalorder %s112, %s113
      %p124 = scmp.eq.s32.totalorder %s20, 0
      %p125 = por %p123, %p124
      %p126 = scmp.ne.s32.totalorder %s112, %s113
      %p127 = scmp.eq.s32.totalorder %s21, 1
      %p128 = por %p126, %p127
      %p130 = scmp.ne.s32.totalorder %s113, %s129
      %p131 = scmp.eq.s32.totalorder %s21, 0
      %p132 = por %p130, %p131
      %p133 = scmp.le.s32.totalorder 1, %s15
      %p134 = scmp.lt.s32.totalorder %s15, 3
      %p135 = pnand %p133, %p134
      %p136 = pneg %p135
      // Predicated region
      $region9: #{tpu_custom_call.1} parent=5 // pred_check
        _
      $region10: #{tpu_custom_call.1} parent=5 // pred_check_branch
        %138 = sbr.rel (%p135) target = $region12
      $region11: #{tpu_custom_call.1} parent=5 // pred_region
        %s139 = ssub.s32 %s15, 1
        // Predicated region
        $region13: #{tpu_custom_call.1} parent=11 // pred_check
          %p140 = pneg %p48
        $region14: #{tpu_custom_call.1} parent=11 // pred_check_branch
          %142 = sbr.rel (%p140) target = $region16
        $region15: #{tpu_custom_call.1} parent=11 // pred_region
          _
        $region16: #{tpu_custom_call.1} parent=11 // pred_fallthru
          _
        // Predicated region
        $region17: #{tpu_custom_call.1} parent=11 // pred_check
          %p143 = pneg %p69
        $region18: #{tpu_custom_call.1} parent=11 // pred_check_branch
          %145 = sbr.rel (%p143) target = $region20
        $region19: #{tpu_custom_call.1} parent=11 // pred_region
          _
        $region20: #{tpu_custom_call.1} parent=11 // pred_fallthru
          _
      $region12: #{tpu_custom_call.1} parent=5 // pred_fallthru
        _
      %p146 = scmp.lt.s32.totalorder %s15, 2
      // Predicated region
      $region21: #{tpu_custom_call.1} parent=5 // pred_check
        %p147 = pneg %p146
      $region22: #{tpu_custom_call.1} parent=5 // pred_check_branch
        %149 = sbr.rel (%p147) target = $region24
      $region23: #{tpu_custom_call.1} parent=5 // pred_region
        // Predicated region
        $region25: #{tpu_custom_call.1} parent=23 // pred_check
          %p150 = pneg %p91
        $region26: #{tpu_custom_call.1} parent=23 // pred_check_branch
          %152 = sbr.rel (%p150) target = $region28
        $region27: #{tpu_custom_call.1} parent=23 // pred_region
          %s153 = sand.u32 %s81, 1
          %s154 = scalar_lea.sflag [#allocation3], %s153
          %s155 = sand.u32 %s81, 1
          %s156 = smul.addr %s155, 16
          %s157 = scalar_lea.vmem [#allocation2], %s156
          %s158 = smul.u32 2, %s23
          %s160 = ssub.s32 256, 256
          %161 = vsyncadd %s154, %s160
          %s162 = smul.addr %s22, 4
          %s163 = sadd.s32 %s158, %s162
          %s164 = smul.addr %s163, 64
          %s165 = scalar_lea.hbm %s2, %s164
          %s166 = sshll.u32 %s157, 4
          %s167 = int_to_ptr.vmem [resolvable:$true] %s166
          %172 = dma.hbm_to_vmem [thread:$0]  %s165, 256, %s167, %s154, 128, 128, 8
        $region28: #{tpu_custom_call.1} parent=23 // pred_fallthru
          _
      $region24: #{tpu_custom_call.1} parent=5 // pred_fallthru
        _
      %p173 = scmp.le.s32.totalorder 1, %s15
      %p174 = scmp.lt.s32.totalorder %s15, 3
      %p175 = pnand %p173, %p174
      %p176 = pneg %p175
      // Predicated region
      $region29: #{tpu_custom_call.1} parent=5 // pred_check
        _
      $region30: #{tpu_custom_call.1} parent=5 // pred_check_branch
        %178 = sbr.rel (%p175) target = $region32
      $region31: #{tpu_custom_call.1} parent=5 // pred_region
        %s179 = ssub.s32 %s15, 1
        %s180 = sand.u32 %s84, 1
        %s181 = scalar_lea.sflag [#allocation3], %s180
        %s182 = sand.u32 %s84, 1
        %s183 = smul.addr %s182, 16
        %s184 = scalar_lea.vmem [#allocation2], %s183
        // Predicated region
        $region33: #{tpu_custom_call.1} parent=31 // pred_check
          %p185 = pneg %p97
        $region34: #{tpu_custom_call.1} parent=31 // pred_check_branch
          %187 = sbr.rel (%p185) target = $region36
        $region35: #{tpu_custom_call.1} parent=31 // pred_region
          %188 = dma.done %s181, 256
        $region36: #{tpu_custom_call.1} parent=31 // pred_fallthru
          _
        %p189 = pneg %p48
        %p190 = pneg %p45
        %p191 = pneg %p69
        %p192 = pneg %p66
        %s193 = sand.u32 %s84, 1
        %s194 = scalar_lea.sflag [#allocation3], %s193
        %s195 = sand.u32 %s84, 1
        %s196 = smul.addr %s195, 16
        %s197 = scalar_lea.vmem [#allocation2], %s196
        %p198 = pneg %p97
        %p199 = pneg %p94
        %p200 = pneg %p125
        %p201 = pneg %p122
        %s202 = sand.u32 %s112, 1
        %s203 = scalar_lea.sflag [#allocation4], %s202
        %s204 = sand.u32 %s112, 1
        %s205 = smul.addr %s204, 16
        %s206 = scalar_lea.vmem [#allocation5], %s205
        %s207 = smul.u32 2, %s25
        %s208 = smul.u32 2, %s25
        %v209 = vld [vmem:[%s0] sm:$0xf]
        %v210 = vld [vmem:[%s1] sm:$0xf]
        %v211 = vld [vmem:[%s184] sm:$0xff]
        %s212 = scalar_lea.vmem %s184, 8 [#allocation2]
        %v213 = vld [vmem:[%s212] sm:$0xff]
        %215 = vset.pattern.permute.xlu0 0
        %216 = vperm.xlu0 %215, %v209
        %v217 = vpop.permute.xlu0 %216
        %v220 = vcombine.high %v211, %v211
        %v222 = vmul.f32 %v217, %v211
        %v223 = vmul.f32 %v217, %v220
        %225 = vset.pattern.permute.xlu0 0
        %226 = vperm.xlu0 %225, %v210
        %v227 = vpop.permute.xlu0 %226
        %v230 = vcombine.high %v213, %v213
        %v232 = vmul.f32 %v227, %v213
        %v233 = vmul.f32 %v227, %v230
        %v234 = vsub.f32 %v222, %v232
        %v235 = vsub.f32 %v223, %v233
        %v238 = vcombine.low %v234, %v235
        %240 = vst [vmem:[%s206] sm:$0xff] %v238
        %v241 = vmul.f32 %v227, %v211
        %v242 = vmul.f32 %v227, %v220
        %v243 = vmul.f32 %v217, %v213
        %v244 = vmul.f32 %v217, %v230
        %v245 = vadd.f32 %v241, %v243
        %v246 = vadd.f32 %v242, %v244
        %v249 = vcombine.low %v245, %v246
        %s251 = scalar_lea.vmem %s206, 8 [#allocation5]
        %252 = vst [vmem:[%s251] sm:$0xff] %v249
        %s253 = sand.u32 %s112, 1
        %s254 = scalar_lea.sflag [#allocation4], %s253
        %s255 = sand.u32 %s112, 1
        %s256 = smul.addr %s255, 16
        %s257 = scalar_lea.vmem [#allocation5], %s256
        // Predicated region
        $region37: #{tpu_custom_call.1} parent=31 // pred_check
          %p258 = pneg %p122
        $region38: #{tpu_custom_call.1} parent=31 // pred_check_branch
          %260 = sbr.rel (%p258) target = $region40
        $region39: #{tpu_custom_call.1} parent=31 // pred_region
          %s261 = smul.u32 2, %s25
          %s263 = ssub.s32 256, 256
          %264 = vsyncadd %s254, %s263
          %s265 = smul.addr %s24, 4
          %s266 = sadd.s32 %s261, %s265
          %s267 = smul.addr %s266, 64
          %s268 = scalar_lea.hbm %s3, %s267
          %s269 = sshll.u32 %s257, 4
          %s270 = int_to_ptr.vmem [resolvable:$true] %s269
          %275 = dma.vmem_to_hbm [thread:$0]  %s270, 256, %s268, %s254, 128, 128, 8
        $region40: #{tpu_custom_call.1} parent=31 // pred_fallthru
          _
      $region32: #{tpu_custom_call.1} parent=5 // pred_fallthru
        _
      %p276 = scmp.le.s32.totalorder 2, %s15
      // Predicated region
      $region41: #{tpu_custom_call.1} parent=5 // pred_check
        %p277 = pneg %p276
      $region42: #{tpu_custom_call.1} parent=5 // pred_check_branch
        %279 = sbr.rel (%p277) target = $region44
      $region43: #{tpu_custom_call.1} parent=5 // pred_region
        %s280 = ssub.s32 %s15, 2
        // Predicated region
        $region45: #{tpu_custom_call.1} parent=43 // pred_check
          %p281 = pneg %p128
        $region46: #{tpu_custom_call.1} parent=43 // pred_check_branch
          %283 = sbr.rel (%p281) target = $region48
        $region47: #{tpu_custom_call.1} parent=43 // pred_region
          %s284 = sand.u32 %s113, 1
          %s285 = scalar_lea.sflag [#allocation4], %s284
          %s286 = sand.u32 %s113, 1
          %s287 = smul.addr %s286, 16
          %s288 = scalar_lea.vmem [#allocation5], %s287
          %289 = dma.done %s285, 256
        $region48: #{tpu_custom_call.1} parent=43 // pred_fallthru
          _
      $region44: #{tpu_custom_call.1} parent=5 // pred_fallthru
        _
    $region6: #{tpu_custom_call.1} parent=1 // loop_footer
      %s19 = sadd.s32 1, %s15
    $region7: #{tpu_custom_call.1} parent=1 // loop_footer_branch
      %14 = sbr.rel target = $region3
    $region8: #{tpu_custom_call.1} parent=1 // loop_exit
      _
    %290 = vsyncpa [#allocation3], 1
    %s291 = scalar_lea.sflag [#allocation3], 1
    %292 = vsyncpa %s291, 1
    %293 = vsyncpa [#allocation4], 1
    %s294 = scalar_lea.sflag [#allocation4], 1
    %295 = vsyncpa %s294, 1

</llo_original>
